<compile_context>
chip_gen: v7x
topology: tpu7x:2x2x1
jax: 0.10.0
libtpu: 0.0.40
codegen_flags: <defaults>
</compile_context>

<pallas_src>
import jax
import jax.numpy as jnp
from jax.experimental import pallas as pl
from jax.experimental.pallas import tpu as pltpu

LEAKY_SLOPE = 0.2   # matches F.leaky_relu(x, 0.2)
DROP_P = 0.3        # matches F.dropout(x, 0.3)


def _round_up(n, m):
    return ((n + m - 1) // m) * m


def _dropout_scale(shape, row0, seed_u32, layer):
    """Inverted-dropout multiplier (0 or 1/(1-p)) from a stateless uint32 hash.

    Pure VPU integer ops (no pltpu PRNG), keyed on (seed, layer, global row, col) so
    different batch tiles and different layers draw independent masks.
    """
    thresh = jnp.uint32(int(DROP_P * (1 << 32)))                 # P(keep) = 1 - p
    salt = jnp.uint32((layer * 0x9E3779B9) & 0xFFFFFFFF)
    r = jax.lax.broadcasted_iota(jnp.int32, shape, 0)
    c = jax.lax.broadcasted_iota(jnp.int32, shape, 1)
    idx = ((row0 + r) * shape[1] + c).astype(jnp.uint32)
    h = idx ^ (seed_u32 + salt)
    # murmur3-style finalizer
    h = h ^ (h >> 16)
    h = h * jnp.uint32(0x7FEB352D)
    h = h ^ (h >> 15)
    h = h * jnp.uint32(0x846CA68B)
    h = h ^ (h >> 16)
    keep = (h >= thresh).astype(jnp.float32)
    return keep * jnp.float32(1.0 / (1.0 - DROP_P))


def discriminator_kernel(seed_ref,
                         x_ref,
                         w1_ref, b1_ref,
                         w2_ref, b2_ref,
                         w3_ref, b3_ref,
                         w4_ref, b4_ref,
                         o_ref):
    tile_b = x_ref.shape[0]
    row0 = pl.program_id(0) * tile_b            # global batch offset of this tile
    seed_u32 = seed_ref[0].astype(jnp.uint32)

    x = x_ref[...]

    # fc1 -> leaky_relu -> dropout   (bf16 operands on the MXU, f32 accumulate)
    h = jnp.dot(x.astype(jnp.bfloat16), w1_ref[...],
                preferred_element_type=jnp.float32) + b1_ref[...]
    h = jnp.where(h >= 0.0, h, LEAKY_SLOPE * h) * _dropout_scale(h.shape, row0, seed_u32, 1)

    # fc2
    h = jnp.dot(h.astype(jnp.bfloat16), w2_ref[...],
                preferred_element_type=jnp.float32) + b2_ref[...]
    h = jnp.where(h >= 0.0, h, LEAKY_SLOPE * h) * _dropout_scale(h.shape, row0, seed_u32, 2)

    # fc3
    h = jnp.dot(h.astype(jnp.bfloat16), w3_ref[...],
                preferred_element_type=jnp.float32) + b3_ref[...]
    h = jnp.where(h >= 0.0, h, LEAKY_SLOPE * h) * _dropout_scale(h.shape, row0, seed_u32, 3)

    # fc4 has out_features == 1: VPU multiply + XLU lane reduction instead of an
    # MXU matmul with N=1 (which would waste the whole MXU result path).
    logits = jnp.sum(h * w4_ref[...], axis=-1, keepdims=True) + b4_ref[...]
    o_ref[...] = jax.nn.sigmoid(logits)


def prepare_params(torch_params):
    """One-time conversion from torch nn.Linear layout to kernel layout.

    W: [out, in] -> [in, out] (bf16 for the MXU layers), b -> [1, out] f32.
    fc4 (out=1) stays f32 as a [1, h3] row for the in-kernel lane reduction.
    """
    p = {}
    for i in (1, 2, 3):
        p[f"w{i}"] = jnp.asarray(torch_params[f"w{i}"]).T.astype(jnp.bfloat16)
        p[f"b{i}"] = jnp.asarray(torch_params[f"b{i}"]).reshape(1, -1).astype(jnp.float32)
    p["w4"] = jnp.asarray(torch_params["w4"]).reshape(1, -1).astype(jnp.float32)
    p["b4"] = jnp.asarray(torch_params["b4"]).reshape(1, 1).astype(jnp.float32)
    return p


def discriminator_forward(x, prepped, seed, *, block_b=256):
    """x: [B, input_dim] float32. prepped: output of prepare_params. seed: int."""
    B, in_dim = x.shape
    h1 = prepped["w1"].shape[1]
    h2 = prepped["w2"].shape[1]
    h3 = prepped["w3"].shape[1]

    # Batch tile: multiple of 8 (sublane), up to block_b (multiple of 128 for MXU rows).
    tile_b = min(block_b, _round_up(B, 8))
    B_pad = _round_up(B, tile_b)
    if B_pad != B:
        x = jnp.pad(x, ((0, B_pad - B), (0, 0)))

    seed_arr = jnp.asarray([seed], dtype=jnp.int32)

    grid_spec = pltpu.PrefetchScalarGridSpec(
        num_scalar_prefetch=1,
        grid=(B_pad // tile_b,),
        in_specs=[
            pl.BlockSpec((tile_b, in_dim), lambda i, s: (i, 0)),   # x: batch-tiled
            pl.BlockSpec((in_dim, h1), lambda i, s: (0, 0)),       # weights stay VMEM-resident
            pl.BlockSpec((1, h1), lambda i, s: (0, 0)),
            pl.BlockSpec((h1, h2), lambda i, s: (0, 0)),
            pl.BlockSpec((1, h2), lambda i, s: (0, 0)),
            pl.BlockSpec((h2, h3), lambda i, s: (0, 0)),
            pl.BlockSpec((1, h3), lambda i, s: (0, 0)),
            pl.BlockSpec((1, h3), lambda i, s: (0, 0)),            # w4 as a row vector
            pl.BlockSpec((1, 1), lambda i, s: (0, 0)),             # b4
        ],
        out_specs=pl.BlockSpec((tile_b, 1), lambda i, s: (i, 0)),
    )

    out = pl.pallas_call(
        discriminator_kernel,
        out_shape=jax.ShapeDtypeStruct((B_pad, 1), jnp.float32),
        grid_spec=grid_spec,
        compiler_params=pltpu.CompilerParams(
            dimension_semantics=("parallel",)),
    )(seed_arr, x,
      prepped["w1"], prepped["b1"],
      prepped["w2"], prepped["b2"],
      prepped["w3"], prepped["b3"],
      prepped["w4"], prepped["b4"])

    return out[:B]


def init_params(key, input_dim, hidden_dim):
    """Deterministic init matching nn.Linear shapes: W ~ U(-1/sqrt(in), 1/sqrt(in))."""
    dims = [(hidden_dim, input_dim),
            (hidden_dim // 2, hidden_dim),
            (hidden_dim // 4, hidden_dim // 2),
            (1, hidden_dim // 4)]
    params = {}
    for i, (out_d, in_d) in enumerate(dims, start=1):
        key, kw, kb = jax.random.split(key, 3)
        bound = 1.0 / (in_d ** 0.5)
        params[f"w{i}"] = jax.random.uniform(kw, (out_d, in_d), jnp.float32, -bound, bound)
        params[f"b{i}"] = jax.random.uniform(kb, (out_d,), jnp.float32, -bound, bound)
    return params


if __name__ == "__main__":
    key = jax.random.PRNGKey(0)
    k_param, k_x = jax.random.split(key)

    B, INPUT_DIM, HIDDEN_DIM = 8, 64, 256
    torch_layout_params = init_params(k_param, INPUT_DIM, HIDDEN_DIM)
    prepped = prepare_params(torch_layout_params)          # one-time layout conversion
    x = jax.random.normal(k_x, (B, INPUT_DIM), dtype=jnp.float32)

    out = discriminator_forward(x, prepped, seed=1234)
    out = jax.block_until_ready(out)

    assert out.shape == (B, 1)
    assert bool(jnp.all((out >= 0.0) & (out <= 1.0)))
    assert bool(jnp.all(jnp.isfinite(out)))
    print("KERNEL_OK")
</pallas_src>

<mosaic_0001>
module attributes {stable_mosaic.version = 11 : i64} {
  func.func @discriminator_kernel(%arg0: i32, %arg1: memref<1xi32, #tpu.memory_space<smem>>, %arg2: memref<8x64xf32, #tpu.memory_space<vmem>>, %arg3: memref<64x256xbf16, #tpu.memory_space<vmem>>, %arg4: memref<1x256xf32, #tpu.memory_space<vmem>>, %arg5: memref<256x128xbf16, #tpu.memory_space<vmem>>, %arg6: memref<1x128xf32, #tpu.memory_space<vmem>>, %arg7: memref<128x64xbf16, #tpu.memory_space<vmem>>, %arg8: memref<1x64xf32, #tpu.memory_space<vmem>>, %arg9: memref<1x64xf32, #tpu.memory_space<vmem>>, %arg10: memref<1x1xf32, #tpu.memory_space<vmem>>, %arg11: memref<8x1xf32, #tpu.memory_space<vmem>>) attributes {dimension_semantics = [#tpu.dimension_semantics<parallel>], iteration_bounds = array<i64: 1>, scalar_prefetch = 1 : i64, scratch_operands = 0 : i64, tpu.core_type = #tpu.core_type<tc>, window_params = [{transform_indices = @transform_0, window_bounds = array<i64: 8, 64>}, {pipeline_mode = #tpu.pipeline_mode<synchronous>, transform_indices = @transform_1, window_bounds = array<i64: 64, 256>}, {pipeline_mode = #tpu.pipeline_mode<synchronous>, transform_indices = @transform_2, window_bounds = array<i64: 1, 256>}, {pipeline_mode = #tpu.pipeline_mode<synchronous>, transform_indices = @transform_3, window_bounds = array<i64: 256, 128>}, {pipeline_mode = #tpu.pipeline_mode<synchronous>, transform_indices = @transform_4, window_bounds = array<i64: 1, 128>}, {pipeline_mode = #tpu.pipeline_mode<synchronous>, transform_indices = @transform_5, window_bounds = array<i64: 128, 64>}, {pipeline_mode = #tpu.pipeline_mode<synchronous>, transform_indices = @transform_6, window_bounds = array<i64: 1, 64>}, {pipeline_mode = #tpu.pipeline_mode<synchronous>, transform_indices = @transform_7, window_bounds = array<i64: 1, 64>}, {pipeline_mode = #tpu.pipeline_mode<synchronous>, transform_indices = @transform_8, window_bounds = array<i64: 1, 1>}, {transform_indices = @transform_9, window_bounds = array<i64: 8, 1>}]} {
    %c8_i32 = arith.constant 8 : i32
    %0 = arith.muli %arg0, %c8_i32 : i32
    %c0 = arith.constant 0 : index
    %1 = memref.load %arg1[%c0] : memref<1xi32, #tpu.memory_space<smem>>
    %c0_0 = arith.constant 0 : index
    %c0_1 = arith.constant 0 : index
    %2 = vector.load %arg2[%c0_0, %c0_1] : memref<8x64xf32, #tpu.memory_space<vmem>>, vector<8x64xf32>
    %3 = arith.truncf %2 : vector<8x64xf32> to vector<8x64xbf16>
    %c0_2 = arith.constant 0 : index
    %c0_3 = arith.constant 0 : index
    %4 = vector.load %arg3[%c0_2, %c0_3] : memref<64x256xbf16, #tpu.memory_space<vmem>>, vector<64x256xbf16>
    %cst = arith.constant dense<0.000000e+00> : vector<8x256xf32>
    %5 = tpu.matmul %3, %4, %cst {dimension_numbers = #tpu.dot_dimension_numbers<[1], [0], [0], [1], [0, 0, 1, 1], [], []>} : vector<8x64xbf16>, vector<64x256xbf16>, vector<8x256xf32> -> vector<8x256xf32>
    %c0_4 = arith.constant 0 : index
    %c0_5 = arith.constant 0 : index
    %6 = vector.load %arg4[%c0_4, %c0_5] : memref<1x256xf32, #tpu.memory_space<vmem>>, vector<1x256xf32>
    %7 = vector.broadcast %6 : vector<1x256xf32> to vector<8x256xf32>
    %8 = arith.addf %5, %7 : vector<8x256xf32>
    %cst_6 = arith.constant 0.000000e+00 : f32
    %9 = vector.broadcast %cst_6 : f32 to vector<8x256xf32>
    %10 = arith.cmpf oge, %8, %9 : vector<8x256xf32>
    %cst_7 = arith.constant 2.000000e-01 : f32
    %11 = vector.broadcast %cst_7 : f32 to vector<8x256xf32>
    %12 = arith.mulf %11, %8 : vector<8x256xf32>
    %13 = arith.select %10, %8, %12 : vector<8x256xi1>, vector<8x256xf32>
    %14 = tpu.iota {dimensions = array<i32: 0>} : vector<8x256xi32>
    %15 = tpu.iota {dimensions = array<i32: 1>} : vector<8x256xi32>
    %16 = vector.broadcast %0 : i32 to vector<8x256xi32>
    %17 = arith.addi %16, %14 : vector<8x256xi32>
    %c256_i32 = arith.constant 256 : i32
    %18 = vector.broadcast %c256_i32 : i32 to vector<8x256xi32>
    %19 = arith.muli %17, %18 : vector<8x256xi32>
    %20 = arith.addi %19, %15 : vector<8x256xi32>
    %c-1640531527_i32 = arith.constant -1640531527 : i32
    %21 = arith.addi %1, %c-1640531527_i32 : i32
    %22 = vector.broadcast %21 : i32 to vector<8x256xi32>
    %23 = arith.xori %20, %22 : vector<8x256xi32>
    %c16_i32 = arith.constant 16 : i32
    %24 = vector.broadcast %c16_i32 : i32 to vector<8x256xi32>
    %25 = arith.shrui %23, %24 : vector<8x256xi32>
    %26 = arith.xori %23, %25 : vector<8x256xi32>
    %c2146121005_i32 = arith.constant 2146121005 : i32
    %27 = vector.broadcast %c2146121005_i32 : i32 to vector<8x256xi32>
    %28 = arith.muli %26, %27 : vector<8x256xi32>
    %c15_i32 = arith.constant 15 : i32
    %29 = vector.broadcast %c15_i32 : i32 to vector<8x256xi32>
    %30 = arith.shrui %28, %29 : vector<8x256xi32>
    %31 = arith.xori %28, %30 : vector<8x256xi32>
    %c-2073254261_i32 = arith.constant -2073254261 : i32
    %32 = vector.broadcast %c-2073254261_i32 : i32 to vector<8x256xi32>
    %33 = arith.muli %31, %32 : vector<8x256xi32>
    %c16_i32_8 = arith.constant 16 : i32
    %34 = vector.broadcast %c16_i32_8 : i32 to vector<8x256xi32>
    %35 = arith.shrui %33, %34 : vector<8x256xi32>
    %36 = arith.xori %33, %35 : vector<8x256xi32>
    %c1288490188_i32 = arith.constant 1288490188 : i32
    %37 = vector.broadcast %c1288490188_i32 : i32 to vector<8x256xi32>
    %38 = arith.cmpi uge, %36, %37 : vector<8x256xi32>
    %39 = arith.extui %38 : vector<8x256xi1> to vector<8x256xi32>
    %40 = arith.sitofp %39 : vector<8x256xi32> to vector<8x256xf32>
    %cst_9 = arith.constant 1.42857146 : f32
    %41 = vector.broadcast %cst_9 : f32 to vector<8x256xf32>
    %42 = arith.mulf %40, %41 : vector<8x256xf32>
    %43 = arith.mulf %13, %42 : vector<8x256xf32>
    %44 = arith.truncf %43 : vector<8x256xf32> to vector<8x256xbf16>
    %c0_10 = arith.constant 0 : index
    %c0_11 = arith.constant 0 : index
    %45 = vector.load %arg5[%c0_10, %c0_11] : memref<256x128xbf16, #tpu.memory_space<vmem>>, vector<256x128xbf16>
    %cst_12 = arith.constant dense<0.000000e+00> : vector<8x128xf32>
    %46 = tpu.matmul %44, %45, %cst_12 {dimension_numbers = #tpu.dot_dimension_numbers<[1], [0], [0], [1], [0, 0, 1, 1], [], []>} : vector<8x256xbf16>, vector<256x128xbf16>, vector<8x128xf32> -> vector<8x128xf32>
    %c0_13 = arith.constant 0 : index
    %c0_14 = arith.constant 0 : index
    %47 = vector.load %arg6[%c0_13, %c0_14] : memref<1x128xf32, #tpu.memory_space<vmem>>, vector<1x128xf32>
    %48 = vector.broadcast %47 : vector<1x128xf32> to vector<8x128xf32>
    %49 = arith.addf %46, %48 : vector<8x128xf32>
    %cst_15 = arith.constant 0.000000e+00 : f32
    %50 = vector.broadcast %cst_15 : f32 to vector<8x128xf32>
    %51 = arith.cmpf oge, %49, %50 : vector<8x128xf32>
    %cst_16 = arith.constant 2.000000e-01 : f32
    %52 = vector.broadcast %cst_16 : f32 to vector<8x128xf32>
    %53 = arith.mulf %52, %49 : vector<8x128xf32>
    %54 = arith.select %51, %49, %53 : vector<8x128xi1>, vector<8x128xf32>
    %55 = tpu.iota {dimensions = array<i32: 0>} : vector<8x128xi32>
    %56 = tpu.iota {dimensions = array<i32: 1>} : vector<8x128xi32>
    %57 = vector.broadcast %0 : i32 to vector<8x128xi32>
    %58 = arith.addi %57, %55 : vector<8x128xi32>
    %c128_i32 = arith.constant 128 : i32
    %59 = vector.broadcast %c128_i32 : i32 to vector<8x128xi32>
    %60 = arith.muli %58, %59 : vector<8x128xi32>
    %61 = arith.addi %60, %56 : vector<8x128xi32>
    %c1013904242_i32 = arith.constant 1013904242 : i32
    %62 = arith.addi %1, %c1013904242_i32 : i32
    %63 = vector.broadcast %62 : i32 to vector<8x128xi32>
    %64 = arith.xori %61, %63 : vector<8x128xi32>
    %c16_i32_17 = arith.constant 16 : i32
    %65 = vector.broadcast %c16_i32_17 : i32 to vector<8x128xi32>
    %66 = arith.shrui %64, %65 : vector<8x128xi32>
    %67 = arith.xori %64, %66 : vector<8x128xi32>
    %c2146121005_i32_18 = arith.constant 2146121005 : i32
    %68 = vector.broadcast %c2146121005_i32_18 : i32 to vector<8x128xi32>
    %69 = arith.muli %67, %68 : vector<8x128xi32>
    %c15_i32_19 = arith.constant 15 : i32
    %70 = vector.broadcast %c15_i32_19 : i32 to vector<8x128xi32>
    %71 = arith.shrui %69, %70 : vector<8x128xi32>
    %72 = arith.xori %69, %71 : vector<8x128xi32>
    %c-2073254261_i32_20 = arith.constant -2073254261 : i32
    %73 = vector.broadcast %c-2073254261_i32_20 : i32 to vector<8x128xi32>
    %74 = arith.muli %72, %73 : vector<8x128xi32>
    %c16_i32_21 = arith.constant 16 : i32
    %75 = vector.broadcast %c16_i32_21 : i32 to vector<8x128xi32>
    %76 = arith.shrui %74, %75 : vector<8x128xi32>
    %77 = arith.xori %74, %76 : vector<8x128xi32>
    %c1288490188_i32_22 = arith.constant 1288490188 : i32
    %78 = vector.broadcast %c1288490188_i32_22 : i32 to vector<8x128xi32>
    %79 = arith.cmpi uge, %77, %78 : vector<8x128xi32>
    %80 = arith.extui %79 : vector<8x128xi1> to vector<8x128xi32>
    %81 = arith.sitofp %80 : vector<8x128xi32> to vector<8x128xf32>
    %cst_23 = arith.constant 1.42857146 : f32
    %82 = vector.broadcast %cst_23 : f32 to vector<8x128xf32>
    %83 = arith.mulf %81, %82 : vector<8x128xf32>
    %84 = arith.mulf %54, %83 : vector<8x128xf32>
    %85 = arith.truncf %84 : vector<8x128xf32> to vector<8x128xbf16>
    %c0_24 = arith.constant 0 : index
    %c0_25 = arith.constant 0 : index
    %86 = vector.load %arg7[%c0_24, %c0_25] : memref<128x64xbf16, #tpu.memory_space<vmem>>, vector<128x64xbf16>
    %cst_26 = arith.constant dense<0.000000e+00> : vector<8x64xf32>
    %87 = tpu.matmul %85, %86, %cst_26 {dimension_numbers = #tpu.dot_dimension_numbers<[1], [0], [0], [1], [0, 0, 1, 1], [], []>} : vector<8x128xbf16>, vector<128x64xbf16>, vector<8x64xf32> -> vector<8x64xf32>
    %c0_27 = arith.constant 0 : index
    %c0_28 = arith.constant 0 : index
    %88 = vector.load %arg8[%c0_27, %c0_28] : memref<1x64xf32, #tpu.memory_space<vmem>>, vector<1x64xf32>
    %89 = vector.broadcast %88 : vector<1x64xf32> to vector<8x64xf32>
    %90 = arith.addf %87, %89 : vector<8x64xf32>
    %cst_29 = arith.constant 0.000000e+00 : f32
    %91 = vector.broadcast %cst_29 : f32 to vector<8x64xf32>
    %92 = arith.cmpf oge, %90, %91 : vector<8x64xf32>
    %cst_30 = arith.constant 2.000000e-01 : f32
    %93 = vector.broadcast %cst_30 : f32 to vector<8x64xf32>
    %94 = arith.mulf %93, %90 : vector<8x64xf32>
    %95 = arith.select %92, %90, %94 : vector<8x64xi1>, vector<8x64xf32>
    %96 = tpu.iota {dimensions = array<i32: 0>} : vector<8x64xi32>
    %97 = tpu.iota {dimensions = array<i32: 1>} : vector<8x64xi32>
    %98 = vector.broadcast %0 : i32 to vector<8x64xi32>
    %99 = arith.addi %98, %96 : vector<8x64xi32>
    %c64_i32 = arith.constant 64 : i32
    %100 = vector.broadcast %c64_i32 : i32 to vector<8x64xi32>
    %101 = arith.muli %99, %100 : vector<8x64xi32>
    %102 = arith.addi %101, %97 : vector<8x64xi32>
    %c-626627285_i32 = arith.constant -626627285 : i32
    %103 = arith.addi %1, %c-626627285_i32 : i32
    %104 = vector.broadcast %103 : i32 to vector<8x64xi32>
    %105 = arith.xori %102, %104 : vector<8x64xi32>
    %c16_i32_31 = arith.constant 16 : i32
    %106 = vector.broadcast %c16_i32_31 : i32 to vector<8x64xi32>
    %107 = arith.shrui %105, %106 : vector<8x64xi32>
    %108 = arith.xori %105, %107 : vector<8x64xi32>
    %c2146121005_i32_32 = arith.constant 2146121005 : i32
    %109 = vector.broadcast %c2146121005_i32_32 : i32 to vector<8x64xi32>
    %110 = arith.muli %108, %109 : vector<8x64xi32>
    %c15_i32_33 = arith.constant 15 : i32
    %111 = vector.broadcast %c15_i32_33 : i32 to vector<8x64xi32>
    %112 = arith.shrui %110, %111 : vector<8x64xi32>
    %113 = arith.xori %110, %112 : vector<8x64xi32>
    %c-2073254261_i32_34 = arith.constant -2073254261 : i32
    %114 = vector.broadcast %c-2073254261_i32_34 : i32 to vector<8x64xi32>
    %115 = arith.muli %113, %114 : vector<8x64xi32>
    %c16_i32_35 = arith.constant 16 : i32
    %116 = vector.broadcast %c16_i32_35 : i32 to vector<8x64xi32>
    %117 = arith.shrui %115, %116 : vector<8x64xi32>
    %118 = arith.xori %115, %117 : vector<8x64xi32>
    %c1288490188_i32_36 = arith.constant 1288490188 : i32
    %119 = vector.broadcast %c1288490188_i32_36 : i32 to vector<8x64xi32>
    %120 = arith.cmpi uge, %118, %119 : vector<8x64xi32>
    %121 = arith.extui %120 : vector<8x64xi1> to vector<8x64xi32>
    %122 = arith.sitofp %121 : vector<8x64xi32> to vector<8x64xf32>
    %cst_37 = arith.constant 1.42857146 : f32
    %123 = vector.broadcast %cst_37 : f32 to vector<8x64xf32>
    %124 = arith.mulf %122, %123 : vector<8x64xf32>
    %125 = arith.mulf %95, %124 : vector<8x64xf32>
    %c0_38 = arith.constant 0 : index
    %c0_39 = arith.constant 0 : index
    %126 = vector.load %arg9[%c0_38, %c0_39] : memref<1x64xf32, #tpu.memory_space<vmem>>, vector<1x64xf32>
    %127 = vector.broadcast %126 : vector<1x64xf32> to vector<8x64xf32>
    %128 = arith.mulf %125, %127 : vector<8x64xf32>
    %cst_40 = arith.constant dense<0.000000e+00> : vector<8xf32>
    %129 = vector.multi_reduction <add>, %128, %cst_40 [1] : vector<8x64xf32> to vector<8xf32>
    %130 = vector.shape_cast %129 : vector<8xf32> to vector<8x1xf32>
    %c0_41 = arith.constant 0 : index
    %c0_42 = arith.constant 0 : index
    %131 = vector.load %arg10[%c0_41, %c0_42] : memref<1x1xf32, #tpu.memory_space<vmem>>, vector<1x1xf32>
    %132 = vector.broadcast %131 : vector<1x1xf32> to vector<8x1xf32>
    %133 = arith.addf %130, %132 : vector<8x1xf32>
    %134 = arith.negf %133 : vector<8x1xf32>
    %135 = math.exp %134 : vector<8x1xf32>
    %cst_43 = arith.constant 1.000000e+00 : f32
    %136 = vector.broadcast %cst_43 : f32 to vector<8x1xf32>
    %137 = arith.addf %136, %135 : vector<8x1xf32>
    %138 = arith.divf %136, %137 : vector<8x1xf32>
    %c0_44 = arith.constant 0 : index
    %c0_45 = arith.constant 0 : index
    %139 = vector.load %arg11[%c0_44, %c0_45] : memref<8x1xf32, #tpu.memory_space<vmem>>, vector<8x1xf32>
    tpu.vector_store %arg11[%c0_44, %c0_45], %138 {strides = array<i32>} : memref<8x1xf32, #tpu.memory_space<vmem>>, vector<8x1xf32>,
    return
  }
  func.func @transform_0(%arg0: i32, %arg1: memref<1xi32, #tpu.memory_space<smem>>) -> (i32, i32) {
    %c0_i32 = arith.constant 0 : i32
    %c0_i32_0 = arith.constant 0 : i32
    return %arg0, %c0_i32 : i32, i32
  }
  func.func @transform_1(%arg0: i32, %arg1: memref<1xi32, #tpu.memory_space<smem>>) -> (i32, i32) {
    %c0_i32 = arith.constant 0 : i32
    %c0_i32_0 = arith.constant 0 : i32
    %c0_i32_1 = arith.constant 0 : i32
    return %c0_i32, %c0_i32_0 : i32, i32
  }
  func.func @transform_2(%arg0: i32, %arg1: memref<1xi32, #tpu.memory_space<smem>>) -> (i32, i32) {
    %c0_i32 = arith.constant 0 : i32
    %c0_i32_0 = arith.constant 0 : i32
    %c0_i32_1 = arith.constant 0 : i32
    return %c0_i32, %c0_i32_0 : i32, i32
  }
  func.func @transform_3(%arg0: i32, %arg1: memref<1xi32, #tpu.memory_space<smem>>) -> (i32, i32) {
    %c0_i32 = arith.constant 0 : i32
    %c0_i32_0 = arith.constant 0 : i32
    %c0_i32_1 = arith.constant 0 : i32
    return %c0_i32, %c0_i32_0 : i32, i32
  }
  func.func @transform_4(%arg0: i32, %arg1: memref<1xi32, #tpu.memory_space<smem>>) -> (i32, i32) {
    %c0_i32 = arith.constant 0 : i32
    %c0_i32_0 = arith.constant 0 : i32
    %c0_i32_1 = arith.constant 0 : i32
    return %c0_i32, %c0_i32_0 : i32, i32
  }
  func.func @transform_5(%arg0: i32, %arg1: memref<1xi32, #tpu.memory_space<smem>>) -> (i32, i32) {
    %c0_i32 = arith.constant 0 : i32
    %c0_i32_0 = arith.constant 0 : i32
    %c0_i32_1 = arith.constant 0 : i32
    return %c0_i32, %c0_i32_0 : i32, i32
  }
  func.func @transform_6(%arg0: i32, %arg1: memref<1xi32, #tpu.memory_space<smem>>) -> (i32, i32) {
    %c0_i32 = arith.constant 0 : i32
    %c0_i32_0 = arith.constant 0 : i32
    %c0_i32_1 = arith.constant 0 : i32
    return %c0_i32, %c0_i32_0 : i32, i32
  }
  func.func @transform_7(%arg0: i32, %arg1: memref<1xi32, #tpu.memory_space<smem>>) -> (i32, i32) {
    %c0_i32 = arith.constant 0 : i32
    %c0_i32_0 = arith.constant 0 : i32
    %c0_i32_1 = arith.constant 0 : i32
    return %c0_i32, %c0_i32_0 : i32, i32
  }
  func.func @transform_8(%arg0: i32, %arg1: memref<1xi32, #tpu.memory_space<smem>>) -> (i32, i32) {
    %c0_i32 = arith.constant 0 : i32
    %c0_i32_0 = arith.constant 0 : i32
    %c0_i32_1 = arith.constant 0 : i32
    return %c0_i32, %c0_i32_0 : i32, i32
  }
  func.func @transform_9(%arg0: i32, %arg1: memref<1xi32, #tpu.memory_space<smem>>) -> (i32, i32) {
    %c0_i32 = arith.constant 0 : i32
    %c0_i32_0 = arith.constant 0 : i32
    return %arg0, %c0_i32 : i32, i32
  }
}

</mosaic_0001>

<llo_original>
// kernel: tpu_custom_call.1
$region0: #{tpu_custom_call.1}
  #allocation0 [shape = 'u32[]', space=smem, size = 0x4, offset = 0x4, fixed_abs, tag = 'smem constant byte address 0x4 - core index']
  #allocation1 [shape = 'u32[144,128]{1,0:T(1,128)}', space=vmem, size = 0x12000, scoped, tag = 'internal scratch']
  #allocation2 [shape = 's32[1]{0}', space=sflag, size = 0x4, scoped, tag = 'scoped memory for tpu_custom_call.1']
  #allocation3 [shape = 's32[1]{0:T(128)S(6)}', space=smem, size = 0x200, scoped, tag = 'prefetched SMEM operand 0']
  #allocation4 [shape = 'f32[1,1]{1,0:T(1,128)S(1)}', space=vmem, size = 0x200, scoped, tag = 'scoped memory for tpu_custom_call.1']
  %s0 = inlined_call_operand.<no memory space> [shape: s32[1], index: 0, kind: input, shape index: {}]
  %s1 = inlined_call_operand.vmem [shape: f32[8,64], index: 1, kind: input, shape index: {}]
  %s2 = inlined_call_operand.vmem [shape: bf16[64,256], index: 2, kind: input, shape index: {}]
  %s3 = inlined_call_operand.vmem [shape: f32[1,256], index: 3, kind: input, shape index: {}]
  %s4 = inlined_call_operand.hbm [shape: bf16[256,128], index: 4, kind: input, shape index: {}]
  %s5 = inlined_call_operand.vmem [shape: f32[1,128], index: 5, kind: input, shape index: {}]
  %s6 = inlined_call_operand.vmem [shape: bf16[128,64], index: 6, kind: input, shape index: {}]
  %s7 = inlined_call_operand.vmem [shape: f32[1,64], index: 7, kind: input, shape index: {}]
  %s8 = inlined_call_operand.vmem [shape: f32[1,64], index: 8, kind: input, shape index: {}]
  %s9 = inlined_call_operand.<no memory space> [shape: f32[1,1], index: 9, kind: input, shape index: {}]
  %s10 = inlined_call_operand.vmem [shape: f32[8,1], index: 10, kind: output, shape index: {}]
  %s11 = sld [smem:[#allocation0]]
  $region50: #{tpu_custom_call.1} parent=0
    _
  %s13 = ssub.s32 1, %s11
  %s14 = scalar_select 0, %s13, %s11
  %15 = sst [smem:[#allocation3]] %s0
  %v16 = vstv %s9
  %17 = vst [vmem:[#allocation4] sm:$0x1] %v16
  $region1: #{tpu_custom_call.1} parent=0
    #allocation5 [shape = 'u8[65536]{0}', space=vmem, size = 0x10000, scoped, tag = 'input window, operand 4, single buffered']
    #allocation6 [shape = 's32[1]{0}', space=sflag, size = 0x4, scoped, tag = 'scoped memory for tpu_custom_call.1']
    %18 = vsyncpa [#allocation6], 0
    // Predicated region
    $region2: #{tpu_custom_call.1} parent=1 // pred_check
      _
    $region3: #{tpu_custom_call.1} parent=1 // pred_check_branch
      %20 = sbr.rel (0) target = $region5
    $region4: #{tpu_custom_call.1} parent=1 // pred_region
      _
    $region5: #{tpu_custom_call.1} parent=1 // pred_fallthru
      _
    // Predicated region
    $region6: #{tpu_custom_call.1} parent=1 // pred_check
      _
    $region7: #{tpu_custom_call.1} parent=1 // pred_check_branch
      %22 = sbr.rel (0) target = $region9
    $region8: #{tpu_custom_call.1} parent=1 // pred_region
      _
    $region9: #{tpu_custom_call.1} parent=1 // pred_fallthru
      _
    // Predicated region
    $region10: #{tpu_custom_call.1} parent=1 // pred_check
      _
    $region11: #{tpu_custom_call.1} parent=1 // pred_check_branch
      %24 = sbr.rel (0) target = $region13
    $region12: #{tpu_custom_call.1} parent=1 // pred_region
      _
    $region13: #{tpu_custom_call.1} parent=1 // pred_fallthru
      _
    // Predicated region
    $region14: #{tpu_custom_call.1} parent=1 // pred_check
      _
    $region15: #{tpu_custom_call.1} parent=1 // pred_check_branch
      %26 = sbr.rel (0) target = $region17
    $region16: #{tpu_custom_call.1} parent=1 // pred_region
      %s28 = ssub.s32 2048, 2048
      %29 = vsyncadd [#allocation6], %s28
      %s30 = sshll.u32 [#allocation5], 4
      %s31 = int_to_ptr.vmem [resolvable:$true] %s30
      %36 = dma.hbm_to_vmem [thread:$0]  %s4, 2048, %s31, [#allocation6], 64, 64, 4
    $region17: #{tpu_custom_call.1} parent=1 // pred_fallthru
      _
    // Predicated region
    $region18: #{tpu_custom_call.1} parent=1 // pred_check
      _
    $region19: #{tpu_custom_call.1} parent=1 // pred_check_branch
      %38 = sbr.rel (0) target = $region21
    $region20: #{tpu_custom_call.1} parent=1 // pred_region
      _
    $region21: #{tpu_custom_call.1} parent=1 // pred_fallthru
      _
    // Predicated region
    $region22: #{tpu_custom_call.1} parent=1 // pred_check
      _
    $region23: #{tpu_custom_call.1} parent=1 // pred_check_branch
      %40 = sbr.rel (0) target = $region25
    $region24: #{tpu_custom_call.1} parent=1 // pred_region
      _
    $region25: #{tpu_custom_call.1} parent=1 // pred_fallthru
      _
    // Predicated region
    $region26: #{tpu_custom_call.1} parent=1 // pred_check
      _
    $region27: #{tpu_custom_call.1} parent=1 // pred_check_branch
      %42 = sbr.rel (0) target = $region29
    $region28: #{tpu_custom_call.1} parent=1 // pred_region
      _
    $region29: #{tpu_custom_call.1} parent=1 // pred_fallthru
      _
    // Predicated region
    $region30: #{tpu_custom_call.1} parent=1 // pred_check
      _
    $region31: #{tpu_custom_call.1} parent=1 // pred_check_branch
      %44 = sbr.rel (0) target = $region33
    $region32: #{tpu_custom_call.1} parent=1 // pred_region
      _
    $region33: #{tpu_custom_call.1} parent=1 // pred_fallthru
      _
    // Predicated region
    $region34: #{tpu_custom_call.1} parent=1 // pred_check
      _
    $region35: #{tpu_custom_call.1} parent=1 // pred_check_branch
      %46 = sbr.rel (0) target = $region37
    $region36: #{tpu_custom_call.1} parent=1 // pred_region
      _
    $region37: #{tpu_custom_call.1} parent=1 // pred_fallthru
      _
    // Predicated region
    $region38: #{tpu_custom_call.1} parent=1 // pred_check
      _
    $region39: #{tpu_custom_call.1} parent=1 // pred_check_branch
      %48 = sbr.rel (0) target = $region41
    $region40: #{tpu_custom_call.1} parent=1 // pred_region
      %49 = dma.done [#allocation6], 2048
    $region41: #{tpu_custom_call.1} parent=1 // pred_fallthru
      _
    %s51 = smul.u32 0, 8
    %s52 = sld [smem:[#allocation3]]
    %v53 = vld [vmem:[%s1] sm:$0xff]
    %v54 = vpack.c.bf16 %v53, %v53
    %v55 = vld [vmem:[%s2] sm:$0xff]
    %v56 = vld [vmem:[%s2 + $0x8] sm:$0xff]
    %v57 = vld [vmem:[%s2 + $0x10] sm:$0xff]
    %v58 = vld [vmem:[%s2 + $0x18] sm:$0xff]
    %v59 = vld [vmem:[%s2 + $0x20] sm:$0xff]
    %v60 = vld [vmem:[%s2 + $0x28] sm:$0xff]
    %v61 = vld [vmem:[%s2 + $0x30] sm:$0xff]
    %v62 = vld [vmem:[%s2 + $0x38] sm:$0xff]
    %v63 = vld [vmem:[%s3] sm:$0x3]
    %v65 = vlaneseq
    %v66 = vshrl.u32 %v65, 7
    %v67 = vsub.s32 0, %v66
    %v68 = vrot.slane %v63, %v67
    %v69 = vlaneseq
    %v70 = vshrl.u32 %v69, 7
    %v71 = vsub.s32 1, %v70
    %v72 = vrot.slane %v63, %v71
    %v83 = vunpack.c.l.b16 %v55
    %v84 = vunpack.c.h.b16 %v55
    %v85 = vunpack.c.l.b16 %v56
    %v86 = vunpack.c.h.b16 %v56
    %v87 = vunpack.c.l.b16 %v57
    %v88 = vunpack.c.h.b16 %v57
    %v89 = vunpack.c.l.b16 %v58
    %v90 = vunpack.c.h.b16 %v58
    %v91 = vunpack.c.l.b16 %v59
    %v92 = vunpack.c.h.b16 %v59
    %v93 = vunpack.c.l.b16 %v60
    %v94 = vunpack.c.h.b16 %v60
    %v95 = vunpack.c.l.b16 %v61
    %v96 = vunpack.c.h.b16 %v61
    %v97 = vunpack.c.l.b16 %v62
    %v98 = vunpack.c.h.b16 %v62
    %v99 = vpack.c.b16 %v85, %v83
    %v100 = vpack.c.b16 %v86, %v84
    %v101 = vpack.c.b16 %v89, %v87
    %v102 = vpack.c.b16 %v90, %v88
    %v103 = vpack.c.b16 %v93, %v91
    %v104 = vpack.c.b16 %v94, %v92
    %v105 = vpack.c.b16 %v97, %v95
    %v106 = vpack.c.b16 %v98, %v96
    %vm115 = vcmask 523264
    %v117 = vsel %vm115, %v54, 0
    %119 = vmatprep.subr.bf16.mxu0 %v100
    %120 = vmatpush1.bf16.msra.mxu0 %v99
    %121 = vmatprep.subr.bf16.mxu0 %v102
    %122 = vmatpush1.bf16.msra.mxu0 %v101
    %123 = vmatprep.subr.bf16.mxu0 %v104
    %124 = vmatpush1.bf16.msra.mxu0 %v103
    %125 = vmatprep.subr.bf16.mxu0 %v106
    %126 = vmatpush1.bf16.msra.mxu0 %v105
    %127 = vmatprep.subr.bf16.mxu0 0
    %128 = vmatpush1.bf16.msra.mxu0 0
    %129 = vmatprep.subr.bf16.mxu0 0
    %130 = vmatpush1.bf16.msra.mxu0 0
    %131 = vmatprep.subr.bf16.mxu0 0
    %132 = vmatpush1.bf16.msra.mxu0 0
    %133 = vmatprep.subr.bf16.mxu0 0
    %134 = vmatpush1.bf16.msra.mxu0 0
    %135 = vmatprep.subr.bf16.mxu0 0
    %136 = vmatpush1.bf16.msra.mxu0 0
    %137 = vmatprep.subr.bf16.mxu0 0
    %138 = vmatpush1.bf16.msra.mxu0 0
    %139 = vmatprep.subr.bf16.mxu0 0
    %140 = vmatpush1.bf16.msra.mxu0 0
    %141 = vmatprep.subr.bf16.mxu0 0
    %142 = vmatpush1.bf16.msra.mxu0 0
    %143 = vmatprep.subr.bf16.mxu0 0
    %144 = vmatpush1.bf16.msra.mxu0 0
    %145 = vmatprep.subr.bf16.mxu0 0
    %146 = vmatpush1.bf16.msra.mxu0 0
    %147 = vmatprep.subr.bf16.mxu0 0
    %148 = vmatpush1.bf16.msra.mxu0 0
    %149 = vmatprep.subr.bf16.mxu0 0
    %150 = vmatpush1.bf16.msra.mxu0 0
    %151 = vmatprep.mubr.bf16.mxu0 0
    %152 = vmatmul.mubr.bf16.gmra.mrb[0].mxu0 %v117
    %v153 = vpop.f32.mrb[0].mxu0
    %v154 = vadd.f32 %v68, %v153
    %v155 = vpop.f32.mrb[0].mxu0
    %v156 = vadd.f32 %v72, %v155
    %v157 = vpop.f32.mrb[0].mxu0
    %v158 = vpop.f32.mrb[0].mxu0
    %159 = vdwg.mxu0
    %vm160 = vcmp.ge.f32.partialorder %v154, 0.0
    %vm161 = vcmp.ge.f32.partialorder %v156, 0.0
    %v162 = vmul.f32 %v154, 0.2
    %v163 = vmul.f32 %v156, 0.2
    %v164 = vsel %vm160, %v154, %v162
    %v165 = vsel %vm161, %v156, %v163
    %v166 = vlaneseq
    %v167 = vshrl.u32 %v166, 7
    %v168 = vlaneseq
    %v169 = vand.u32 %v168, 127
    %v170 = vadd.s32 %v169, 128
    %v171 = vstv %s51
    %v172 = vadd.s32 %v171, %v167
    %v173 = vmul.u32 %v172, 256
    %v174 = vadd.s32 %v173, %v169
    %v175 = vadd.s32 %v173, %v170
    %s176 = sadd.s32 %s52, 2654435769
    %v177 = vstv %s176
    %v178 = vxor.u32 %v174, %v177
    %v179 = vxor.u32 %v175, %v177
    %v180 = vshrl.u32 %v178, 16
    %v181 = vshrl.u32 %v179, 16
    %v182 = vxor.u32 %v178, %v180
    %v183 = vxor.u32 %v179, %v181
    %v184 = vmul.u32 %v182, 2146121005
    %v185 = vmul.u32 %v183, 2146121005
    %v186 = vshrl.u32 %v184, 15
    %v187 = vshrl.u32 %v185, 15
    %v188 = vxor.u32 %v184, %v186
    %v189 = vxor.u32 %v185, %v187
    %v190 = vmul.u32 %v188, 2221713035
    %v191 = vmul.u32 %v189, 2221713035
    %v192 = vshrl.u32 %v190, 16
    %v193 = vshrl.u32 %v191, 16
    %v194 = vxor.u32 %v190, %v192
    %v195 = vxor.u32 %v191, %v193
    %vm196 = vcmp.ge.u32.totalorder %v194, 1288490188
    %vm197 = vcmp.ge.u32.totalorder %v195, 1288490188
    %v198 = vsel %vm196, 1, 0
    %v199 = vsel %vm197, 1, 0
    %v200 = vcvt.s32.f32 %v198
    %v201 = vcvt.s32.f32 %v199
    %v202 = vmul.f32 %v200, 1.4285715
    %v203 = vmul.f32 %v201, 1.4285715
    %v204 = vmul.f32 %v164, %v202
    %v205 = vmul.f32 %v165, %v203
    %v206 = vpack.c.bf16 %v204, %v204
    %v207 = vpack.c.bf16 %v205, %v205
    %v208 = vld [vmem:[#allocation5] sm:$0xf]
    %v209 = vld [vmem:[#allocation5 + $0x4] sm:$0xf]
    %v210 = vld [vmem:[#allocation5 + $0x8] sm:$0xf]
    %v211 = vld [vmem:[#allocation5 + $0xc] sm:$0xf]
    %v212 = vld [vmem:[#allocation5 + $0x10] sm:$0xf]
    %v213 = vld [vmem:[#allocation5 + $0x14] sm:$0xf]
    %v214 = vld [vmem:[#allocation5 + $0x18] sm:$0xf]
    %v215 = vld [vmem:[#allocation5 + $0x1c] sm:$0xf]
    %v216 = vld [vmem:[#allocation5 + $0x20] sm:$0xf]
    %v217 = vld [vmem:[#allocation5 + $0x24] sm:$0xf]
    %v218 = vld [vmem:[#allocation5 + $0x28] sm:$0xf]
    %v219 = vld [vmem:[#allocation5 + $0x2c] sm:$0xf]
    %v220 = vld [vmem:[#allocation5 + $0x30] sm:$0xf]
    %v221 = vld [vmem:[#allocation5 + $0x34] sm:$0xf]
    %v222 = vld [vmem:[#allocation5 + $0x38] sm:$0xf]
    %v223 = vld [vmem:[#allocation5 + $0x3c] sm:$0xf]
    %v224 = vld [vmem:[#allocation5 + $0x40] sm:$0xf]
    %v225 = vld [vmem:[#allocation5 + $0x44] sm:$0xf]
    %v226 = vld [vmem:[#allocation5 + $0x48] sm:$0xf]
    %v227 = vld [vmem:[#allocation5 + $0x4c] sm:$0xf]
    %v228 = vld [vmem:[#allocation5 + $0x50] sm:$0xf]
    %v229 = vld [vmem:[#allocation5 + $0x54] sm:$0xf]
    %v230 = vld [vmem:[#allocation5 + $0x58] sm:$0xf]
    %v231 = vld [vmem:[#allocation5 + $0x5c] sm:$0xf]
    %v232 = vld [vmem:[#allocation5 + $0x60] sm:$0xf]
    %v233 = vld [vmem:[#allocation5 + $0x64] sm:$0xf]
    %v234 = vld [vmem:[#allocation5 + $0x68] sm:$0xf]
    %v235 = vld [vmem:[#allocation5 + $0x6c] sm:$0xf]
    %v236 = vld [vmem:[#allocation5 + $0x70] sm:$0xf]
    %v237 = vld [vmem:[#allocation5 + $0x74] sm:$0xf]
    %v238 = vld [vmem:[#allocation5 + $0x78] sm:$0xf]
    %v239 = vld [vmem:[#allocation5 + $0x7c] sm:$0xf]
    %v240 = vld [vmem:[%s5] sm:$0x1]
    %v242 = vlaneseq
    %v243 = vshrl.u32 %v242, 7
    %v244 = vsub.s32 0, %v243
    %v245 = vrot.slane %v240, %v244
    %v279 = vunpack.c.l.b16 %v208
    %v280 = vunpack.c.l.b16 %v209
    %v281 = vunpack.c.l.b16 %v210
    %v282 = vunpack.c.l.b16 %v211
    %v283 = vunpack.c.l.b16 %v212
    %v284 = vunpack.c.l.b16 %v213
    %v285 = vunpack.c.l.b16 %v214
    %v286 = vunpack.c.l.b16 %v215
    %v287 = vunpack.c.l.b16 %v216
    %v288 = vunpack.c.l.b16 %v217
    %v289 = vunpack.c.l.b16 %v218
    %v290 = vunpack.c.l.b16 %v219
    %v291 = vunpack.c.l.b16 %v220
    %v292 = vunpack.c.l.b16 %v221
    %v293 = vunpack.c.l.b16 %v222
    %v294 = vunpack.c.l.b16 %v223
    %v295 = vunpack.c.l.b16 %v224
    %v296 = vunpack.c.l.b16 %v225
    %v297 = vunpack.c.l.b16 %v226
    %v298 = vunpack.c.l.b16 %v227
    %v299 = vunpack.c.l.b16 %v228
    %v300 = vunpack.c.l.b16 %v229
    %v301 = vunpack.c.l.b16 %v230
    %v302 = vunpack.c.l.b16 %v231
    %v303 = vunpack.c.l.b16 %v232
    %v304 = vunpack.c.l.b16 %v233
    %v305 = vunpack.c.l.b16 %v234
    %v306 = vunpack.c.l.b16 %v235
    %v307 = vunpack.c.l.b16 %v236
    %v308 = vunpack.c.l.b16 %v237
    %v309 = vunpack.c.l.b16 %v238
    %v310 = vunpack.c.l.b16 %v239
    %v311 = vpack.c.b16 %v280, %v279
    %v312 = vpack.c.b16 %v282, %v281
    %v313 = vpack.c.b16 %v284, %v283
    %v314 = vpack.c.b16 %v286, %v285
    %v315 = vpack.c.b16 %v288, %v287
    %v316 = vpack.c.b16 %v290, %v289
    %v317 = vpack.c.b16 %v292, %v291
    %v318 = vpack.c.b16 %v294, %v293
    %v319 = vpack.c.b16 %v296, %v295
    %v320 = vpack.c.b16 %v298, %v297
    %v321 = vpack.c.b16 %v300, %v299
    %v322 = vpack.c.b16 %v302, %v301
    %v323 = vpack.c.b16 %v304, %v303
    %v324 = vpack.c.b16 %v306, %v305
    %v325 = vpack.c.b16 %v308, %v307
    %v326 = vpack.c.b16 %v310, %v309
    %343 = vmatprep.subr.bf16.mxu0 0
    %344 = vmatpush1.bf16.msra.mxu0 %v311
    %345 = vmatprep.subr.bf16.mxu0 0
    %346 = vmatpush1.bf16.msra.mxu0 %v312
    %347 = vmatprep.subr.bf16.mxu0 0
    %348 = vmatpush1.bf16.msra.mxu0 %v313
    %349 = vmatprep.subr.bf16.mxu0 0
    %350 = vmatpush1.bf16.msra.mxu0 %v314
    %351 = vmatprep.subr.bf16.mxu0 0
    %352 = vmatpush1.bf16.msra.mxu0 %v315
    %353 = vmatprep.subr.bf16.mxu0 0
    %354 = vmatpush1.bf16.msra.mxu0 %v316
    %355 = vmatprep.subr.bf16.mxu0 0
    %356 = vmatpush1.bf16.msra.mxu0 %v317
    %357 = vmatprep.subr.bf16.mxu0 0
    %358 = vmatpush1.bf16.msra.mxu0 %v318
    %359 = vmatprep.subr.bf16.mxu0 0
    %360 = vmatpush1.bf16.msra.mxu0 %v319
    %361 = vmatprep.subr.bf16.mxu0 0
    %362 = vmatpush1.bf16.msra.mxu0 %v320
    %363 = vmatprep.subr.bf16.mxu0 0
    %364 = vmatpush1.bf16.msra.mxu0 %v321
    %365 = vmatprep.subr.bf16.mxu0 0
    %366 = vmatpush1.bf16.msra.mxu0 %v322
    %367 = vmatprep.subr.bf16.mxu0 0
    %368 = vmatpush1.bf16.msra.mxu0 %v323
    %369 = vmatprep.subr.bf16.mxu0 0
    %370 = vmatpush1.bf16.msra.mxu0 %v324
    %371 = vmatprep.subr.bf16.mxu0 0
    %372 = vmatpush1.bf16.msra.mxu0 %v325
    %373 = vmatprep.subr.bf16.mxu0 0
    %374 = vmatpush1.bf16.msra.mxu0 %v326
    %375 = vmatprep.mubr.bf16.mxu0 %v207
    %376 = vmatmul.mubr.bf16.gmra.mrb[0].mxu0 %v206
    %v377 = vpop.f32.mrb[0].mxu0
    %v378 = vadd.f32 %v245, %v377
    %v379 = vpop.f32.mrb[0].mxu0
    %v380 = vpop.f32.mrb[0].mxu0
    %v381 = vpop.f32.mrb[0].mxu0
    %382 = vdwg.mxu0
    %vm383 = vcmp.ge.f32.partialorder %v378, 0.0
    %v384 = vmul.f32 %v378, 0.2
    %v385 = vsel %vm383, %v378, %v384
    %v386 = vmul.u32 %v172, 128
    %v387 = vadd.s32 %v386, %v169
    %s388 = sadd.s32 %s52, 1013904242
    %v389 = vstv %s388
    %v390 = vxor.u32 %v387, %v389
    %v391 = vshrl.u32 %v390, 16
    %v392 = vxor.u32 %v390, %v391
    %v393 = vmul.u32 %v392, 2146121005
    %v394 = vshrl.u32 %v393, 15
    %v395 = vxor.u32 %v393, %v394
    %v396 = vmul.u32 %v395, 2221713035
    %v397 = vshrl.u32 %v396, 16
    %v398 = vxor.u32 %v396, %v397
    %vm399 = vcmp.ge.u32.totalorder %v398, 1288490188
    %v400 = vsel %vm399, 1, 0
    %v401 = vcvt.s32.f32 %v400
    %v402 = vmul.f32 %v401, 1.4285715
    %v403 = vmul.f32 %v385, %v402
    %v404 = vpack.c.bf16 %v403, %v403
    %v405 = vld [vmem:[%s6] sm:$0xf]
    %v406 = vld [vmem:[%s6 + $0x4] sm:$0xf]
    %v407 = vld [vmem:[%s6 + $0x8] sm:$0xf]
    %v408 = vld [vmem:[%s6 + $0xc] sm:$0xf]
    %v409 = vld [vmem:[%s6 + $0x10] sm:$0xf]
    %v410 = vld [vmem:[%s6 + $0x14] sm:$0xf]
    %v411 = vld [vmem:[%s6 + $0x18] sm:$0xf]
    %v412 = vld [vmem:[%s6 + $0x1c] sm:$0xf]
    %v413 = vld [vmem:[%s6 + $0x20] sm:$0xf]
    %v414 = vld [vmem:[%s6 + $0x24] sm:$0xf]
    %v415 = vld [vmem:[%s6 + $0x28] sm:$0xf]
    %v416 = vld [vmem:[%s6 + $0x2c] sm:$0xf]
    %v417 = vld [vmem:[%s6 + $0x30] sm:$0xf]
    %v418 = vld [vmem:[%s6 + $0x34] sm:$0xf]
    %v419 = vld [vmem:[%s6 + $0x38] sm:$0xf]
    %v420 = vld [vmem:[%s6 + $0x3c] sm:$0xf]
    %v421 = vld [vmem:[%s7] sm:$0x1]
    %v423 = vlaneseq
    %v424 = vshrl.u32 %v423, 7
    %v425 = vsub.s32 0, %v424
    %v426 = vrot.slane %v421, %v425
    %v444 = vunpack.c.l.b16 %v405
    %v445 = vunpack.c.l.b16 %v406
    %v446 = vunpack.c.l.b16 %v407
    %v447 = vunpack.c.l.b16 %v408
    %v448 = vunpack.c.l.b16 %v409
    %v449 = vunpack.c.l.b16 %v410
    %v450 = vunpack.c.l.b16 %v411
    %v451 = vunpack.c.l.b16 %v412
    %v452 = vunpack.c.l.b16 %v413
    %v453 = vunpack.c.l.b16 %v414
    %v454 = vunpack.c.l.b16 %v415
    %v455 = vunpack.c.l.b16 %v416
    %v456 = vunpack.c.l.b16 %v417
    %v457 = vunpack.c.l.b16 %v418
    %v458 = vunpack.c.l.b16 %v419
    %v459 = vunpack.c.l.b16 %v420
    %v460 = vpack.c.b16 %v445, %v444
    %v461 = vpack.c.b16 %v447, %v446
    %v462 = vpack.c.b16 %v449, %v448
    %v463 = vpack.c.b16 %v451, %v450
    %v464 = vpack.c.b16 %v453, %v452
    %v465 = vpack.c.b16 %v455, %v454
    %v466 = vpack.c.b16 %v457, %v456
    %v467 = vpack.c.b16 %v459, %v458
    %476 = vmatprep.subr.bf16.mxu0 0
    %477 = vmatpush1.bf16.msra.mxu0 %v460
    %478 = vmatprep.subr.bf16.mxu0 0
    %479 = vmatpush1.bf16.msra.mxu0 %v461
    %480 = vmatprep.subr.bf16.mxu0 0
    %481 = vmatpush1.bf16.msra.mxu0 %v462
    %482 = vmatprep.subr.bf16.mxu0 0
    %483 = vmatpush1.bf16.msra.mxu0 %v463
    %484 = vmatprep.subr.bf16.mxu0 0
    %485 = vmatpush1.bf16.msra.mxu0 %v464
    %486 = vmatprep.subr.bf16.mxu0 0
    %487 = vmatpush1.bf16.msra.mxu0 %v465
    %488 = vmatprep.subr.bf16.mxu0 0
    %489 = vmatpush1.bf16.msra.mxu0 %v466
    %490 = vmatprep.subr.bf16.mxu0 0
    %491 = vmatpush1.bf16.msra.mxu0 %v467
    %492 = vmatprep.subr.bf16.mxu0 0
    %493 = vmatpush1.bf16.msra.mxu0 0
    %494 = vmatprep.subr.bf16.mxu0 0
    %495 = vmatpush1.bf16.msra.mxu0 0
    %496 = vmatprep.subr.bf16.mxu0 0
    %497 = vmatpush1.bf16.msra.mxu0 0
    %498 = vmatprep.subr.bf16.mxu0 0
    %499 = vmatpush1.bf16.msra.mxu0 0
    %500 = vmatprep.subr.bf16.mxu0 0
    %501 = vmatpush1.bf16.msra.mxu0 0
    %502 = vmatprep.subr.bf16.mxu0 0
    %503 = vmatpush1.bf16.msra.mxu0 0
    %504 = vmatprep.subr.bf16.mxu0 0
    %505 = vmatpush1.bf16.msra.mxu0 0
    %506 = vmatprep.subr.bf16.mxu0 0
    %507 = vmatpush1.bf16.msra.mxu0 0
    %508 = vmatprep.mubr.bf16.mxu0 0
    %509 = vmatmul.mubr.bf16.gmra.mrb[0].mxu0 %v404
    %v510 = vpop.f32.mrb[0].mxu0
    %v511 = vadd.f32 %v426, %v510
    %v512 = vpop.f32.mrb[0].mxu0
    %v513 = vpop.f32.mrb[0].mxu0
    %v514 = vpop.f32.mrb[0].mxu0
    %515 = vdwg.mxu0
    %vm516 = vcmp.ge.f32.partialorder %v511, 0.0
    %v517 = vmul.f32 %v511, 0.2
    %v518 = vsel %vm516, %v511, %v517
    %v519 = vmul.u32 %v172, 64
    %v520 = vadd.s32 %v519, %v169
    %s521 = sadd.s32 %s52, 3668340011
    %v522 = vstv %s521
    %v523 = vxor.u32 %v520, %v522
    %v524 = vshrl.u32 %v523, 16
    %v525 = vxor.u32 %v523, %v524
    %v526 = vmul.u32 %v525, 2146121005
    %v527 = vshrl.u32 %v526, 15
    %v528 = vxor.u32 %v526, %v527
    %v529 = vmul.u32 %v528, 2221713035
    %v530 = vshrl.u32 %v529, 16
    %v531 = vxor.u32 %v529, %v530
    %vm532 = vcmp.ge.u32.totalorder %v531, 1288490188
    %v533 = vsel %vm532, 1, 0
    %v534 = vcvt.s32.f32 %v533
    %v535 = vmul.f32 %v534, 1.4285715
    %v536 = vmul.f32 %v518, %v535
    %v537 = vld [vmem:[%s8] sm:$0x1]
    %v539 = vlaneseq
    %v540 = vshrl.u32 %v539, 7
    %v541 = vsub.s32 0, %v540
    %v542 = vrot.slane %v537, %v541
    %v544 = vmul.f32 %v536, %v542
    %v545 = vsel %vm115, %v544, 0.0
    %546 = vadd.xlane.f32.xlu0 %v545
    %v547 = vpop.xlane.xlu0 %546
    %v548 = vld [vmem:[#allocation4] sm:$0x1]
    %v550 = vlaneseq
    %v551 = vshrl.u32 %v550, 7
    %v552 = vsub.s32 0, %v551
    %v553 = vrot.slane %v548, %v552
    %v555 = vadd.f32 %v547, %v553
    %v556 = vxor.u32 %v555, 2147483648
    %v557 = vmul.f32 %v556, 1.442695
    %v558 = vpow.pop %v557
    %v559 = vadd.f32 %v558, 1.0
    %v560 = vrcp.pop %v559
    %v561 = vmul.f32 1.0, %v560
    %vm562 = vcmask 7168
    %563 = vst.msk [vmem:[%s10] sm:$0xff] %vm562, %v561
    // Predicated region
    $region42: #{tpu_custom_call.1} parent=1 // pred_check
      _
    $region43: #{tpu_custom_call.1} parent=1 // pred_check_branch
      %565 = sbr.rel (0) target = $region45
    $region44: #{tpu_custom_call.1} parent=1 // pred_region
      _
    $region45: #{tpu_custom_call.1} parent=1 // pred_fallthru
      _
    // Predicated region
    $region46: #{tpu_custom_call.1} parent=1 // pred_check
      _
    $region47: #{tpu_custom_call.1} parent=1 // pred_check_branch
      %567 = sbr.rel (0) target = $region49
    $region48: #{tpu_custom_call.1} parent=1 // pred_region
      _
    $region49: #{tpu_custom_call.1} parent=1 // pred_fallthru
      _
    %568 = vsyncpa [#allocation6], 1

</llo_original>
